<compile_context>
chip_gen: v5e
topology: v5e:2x2
jax: 0.10.0
libtpu: 0.0.40
codegen_flags: <defaults>
</compile_context>

<pallas_src>
import jax
import jax.numpy as jnp
from jax import lax
from jax.experimental import pallas as pl
from jax.experimental.pallas import tpu as pltpu


def _make_kernel(H, W, C_in, C_mid, C_out):
    Wp = W + 2                  # padded row width (1 left + 1 right zero column)
    N = H * Wp                  # conv-window / accumulator length (lane axis)
    Lbuf = (H + 3) * Wp         # padded-flat activation length (1 top + 2 bottom rows)
    TAPS = tuple(dy * Wp + dx for dy in range(3) for dx in range(3))

    def kernel(x_ref, m_ref, w1_ref, s1_ref, t1_ref, w2_ref, s2_ref, t2_ref,
               o_ref, h1p_ref, xcol_ref, hcol_ref):
        # ---- conv1: im2col slab (9*C_in, N) from 9 lane-shifted window loads,
        #      then a single MXU matmul with K = 9*C_in.
        for k, s in enumerate(TAPS):
            xcol_ref[k * C_in:(k + 1) * C_in, :] = (
                x_ref[0, :, s:s + N].astype(jnp.float32))
        acc1 = jnp.dot(w1_ref[...], xcol_ref[...],
                       preferred_element_type=jnp.float32)            # (C_mid, N)

        # folded BN + ReLU; zero the 2 junk lanes per row (they land exactly on
        # conv2's zero-pad columns when stored into the padded hidden buffer).
        h1 = jnp.maximum(acc1 * s1_ref[...] + t1_ref[...], 0.0) * m_ref[...]

        # ---- re-pad the hidden activation in its flat layout:
        # only the tiny halo head/tail lanes are zeroed (core-partition safe),
        # the interior is one contiguous lane-offset store of h1.
        h1p_ref[:, 0:Wp + 1] = jnp.zeros((C_mid, Wp + 1), jnp.float32)
        h1p_ref[:, (H + 1) * Wp + 1:Lbuf] = jnp.zeros(
            (C_mid, Lbuf - (H + 1) * Wp - 1), jnp.float32)
        h1p_ref[:, Wp + 1:Wp + 1 + N] = h1

        # ---- conv2: same im2col + single matmul, folded BN + ReLU.
        for k, s in enumerate(TAPS):
            hcol_ref[k * C_mid:(k + 1) * C_mid, :] = h1p_ref[:, s:s + N]
        acc2 = jnp.dot(w2_ref[...], hcol_ref[...],
                       preferred_element_type=jnp.float32)            # (C_out, N)
        h2 = jnp.maximum(acc2 * s2_ref[...] + t2_ref[...], 0.0)
        o_ref[0] = h2.astype(o_ref.dtype)                              # lane-dense store

    return kernel, Wp, N, Lbuf


@jax.jit
def double_conv2d(x_nchw, w1, bn1, w2, bn2):
    """DoubleConv2d.forward (eval-mode BatchNorm folded into scale/shift).

    x_nchw: (B, C_in, H, W)
    w1: (C_mid, C_in, 3, 3), w2: (C_out, C_mid, 3, 3)   (PyTorch OIHW, bias=False)
    bn*: (gamma, beta, running_mean, running_var, eps)
    """
    B, C_in, H, W = x_nchw.shape
    C_mid = w1.shape[0]
    C_out = w2.shape[0]
    assert w1.shape[2:] == (3, 3) and w2.shape[2:] == (3, 3)

    kernel, Wp, N, Lbuf = _make_kernel(H, W, C_in, C_mid, C_out)

    # Zero-pad spatially in the wrapper (1 top / 2 bottom guard rows, 1 left / 1 right
    # column) and flatten the padded rows onto the lane axis; reshaping the freshly
    # padded (contiguous) array is free.  Layout stays channels-major -- no transpose.
    x_pad = jnp.pad(x_nchw, ((0, 0), (0, 0), (1, 2), (1, 1))).reshape(B, C_in, Lbuf)

    # OIHW -> (C_out, 9*C_in): contraction dim ordered tap-major (k = ky*3 + kx),
    # input-channel minor, matching the im2col slab row order built in the kernel.
    w1_col = jnp.transpose(w1, (0, 2, 3, 1)).reshape(C_mid, 9 * C_in).astype(jnp.float32)
    w2_col = jnp.transpose(w2, (0, 2, 3, 1)).reshape(C_out, 9 * C_mid).astype(jnp.float32)

    def fold_bn(bn):
        g, b, mean, var, eps = bn
        scale = (g / jnp.sqrt(var + eps)).astype(jnp.float32)
        shift = b.astype(jnp.float32) - mean.astype(jnp.float32) * scale
        return scale.reshape(-1, 1), shift.reshape(-1, 1)   # (C, 1): sublane broadcast

    s1, t1 = fold_bn(bn1)
    s2, t2 = fold_bn(bn2)

    # 1.0 on the W valid lanes of each padded row, 0.0 on the 2 junk lanes.
    col = jnp.arange(Wp, dtype=jnp.int32)
    colmask = jnp.tile((col < W).astype(jnp.float32), H).reshape(1, N)

    out = pl.pallas_call(
        kernel,
        out_shape=jax.ShapeDtypeStruct((B, C_out, N), x_nchw.dtype),
        grid=(B,),
        in_specs=[
            pl.BlockSpec((1, C_in, Lbuf), lambda b: (b, 0, 0)),
            pl.BlockSpec((1, N), lambda b: (0, 0)),
            pl.BlockSpec((C_mid, 9 * C_in), lambda b: (0, 0)),
            pl.BlockSpec((C_mid, 1), lambda b: (0, 0)),
            pl.BlockSpec((C_mid, 1), lambda b: (0, 0)),
            pl.BlockSpec((C_out, 9 * C_mid), lambda b: (0, 0)),
            pl.BlockSpec((C_out, 1), lambda b: (0, 0)),
            pl.BlockSpec((C_out, 1), lambda b: (0, 0)),
        ],
        out_specs=pl.BlockSpec((1, C_out, N), lambda b: (b, 0, 0)),
        scratch_shapes=[
            pltpu.VMEM((C_mid, Lbuf), jnp.float32),      # padded-flat hidden activation
            pltpu.VMEM((9 * C_in, N), jnp.float32),      # im2col slab, conv1
            pltpu.VMEM((9 * C_mid, N), jnp.float32),     # im2col slab, conv2
        ],
        compiler_params=pltpu.CompilerParams(
            dimension_semantics=("parallel",)),
    )(x_pad, colmask, w1_col, s1, t1, w2_col, s2, t2)

    # (B, C_out, H*(W+2)): free reshape + drop the 2 junk lanes per row -> NCHW.
    return out.reshape(B, C_out, H, Wp)[:, :, :, :W]


def _reference(x, w1, bn1, w2, bn2):
    """Pure-JAX (XLA) reference with identical eval-mode BN semantics."""
    def block(x, w, bn):
        y = lax.conv_general_dilated(
            x, w, window_strides=(1, 1), padding=((1, 1), (1, 1)),
            dimension_numbers=("NCHW", "OIHW", "NCHW"),
            precision=lax.Precision.HIGHEST)
        g, b, mean, var, eps = bn
        y = (y - mean.reshape(1, -1, 1, 1)) / jnp.sqrt(var.reshape(1, -1, 1, 1) + eps)
        y = y * g.reshape(1, -1, 1, 1) + b.reshape(1, -1, 1, 1)
        return jnp.maximum(y, 0.0)
    return block(block(x, w1, bn1), w2, bn2)


if __name__ == "__main__":
    key = jax.random.PRNGKey(0)
    B, C_in, H, W = 2, 4, 16, 16
    C_out = 8
    C_mid = C_out          # DoubleConv2d default: mid_channels = out_channels
    eps = 1e-5             # PyTorch BatchNorm2d default

    ks = jax.random.split(key, 11)
    x = jax.random.normal(ks[0], (B, C_in, H, W), jnp.float32)
    w1 = 0.2 * jax.random.normal(ks[1], (C_mid, C_in, 3, 3), jnp.float32)
    w2 = 0.2 * jax.random.normal(ks[2], (C_out, C_mid, 3, 3), jnp.float32)

    def bn_params(kg, kb, km, kv, C):
        g = 1.0 + 0.1 * jax.random.normal(kg, (C,), jnp.float32)
        b = 0.05 * jax.random.normal(kb, (C,), jnp.float32)
        m = 0.1 * jax.random.normal(km, (C,), jnp.float32)
        v = jax.random.uniform(kv, (C,), jnp.float32, 0.5, 1.5)
        return (g, b, m, v, eps)

    bn1 = bn_params(ks[3], ks[4], ks[5], ks[6], C_mid)
    bn2 = bn_params(ks[7], ks[8], ks[9], ks[10], C_out)

    out = double_conv2d(x, w1, bn1, w2, bn2)
    jax.block_until_ready(out)
    assert out.shape == (B, C_out, H, W)

    ref = _reference(x, w1, bn1, w2, bn2)
    max_err = float(jnp.max(jnp.abs(out - ref)))
    assert max_err < 1e-4, f"max abs err vs reference: {max_err}"

    print("KERNEL_OK")
</pallas_src>

<mosaic_0001>
module attributes {stable_mosaic.version = 11 : i64} {
  func.func @kernel(%arg0: i32, %arg1: memref<1x4x342xf32, #tpu.memory_space<vmem>>, %arg2: memref<1x288xf32, #tpu.memory_space<vmem>>, %arg3: memref<8x36xf32, #tpu.memory_space<vmem>>, %arg4: memref<8x1xf32, #tpu.memory_space<vmem>>, %arg5: memref<8x1xf32, #tpu.memory_space<vmem>>, %arg6: memref<8x72xf32, #tpu.memory_space<vmem>>, %arg7: memref<8x1xf32, #tpu.memory_space<vmem>>, %arg8: memref<8x1xf32, #tpu.memory_space<vmem>>, %arg9: memref<1x8x288xf32, #tpu.memory_space<vmem>>, %arg10: memref<8x342xf32, #tpu.memory_space<vmem>>, %arg11: memref<36x288xf32, #tpu.memory_space<vmem>>, %arg12: memref<72x288xf32, #tpu.memory_space<vmem>>) attributes {dimension_semantics = [#tpu.dimension_semantics<parallel>], iteration_bounds = array<i64: 2>, scalar_prefetch = 0 : i64, scratch_operands = 3 : i64, tpu.core_type = #tpu.core_type<tc>, window_params = [{transform_indices = @transform_0, window_bounds = array<i64: 1, 4, 342>}, {pipeline_mode = #tpu.pipeline_mode<synchronous>, transform_indices = @transform_1, window_bounds = array<i64: 1, 288>}, {pipeline_mode = #tpu.pipeline_mode<synchronous>, transform_indices = @transform_2, window_bounds = array<i64: 8, 36>}, {pipeline_mode = #tpu.pipeline_mode<synchronous>, transform_indices = @transform_3, window_bounds = array<i64: 8, 1>}, {pipeline_mode = #tpu.pipeline_mode<synchronous>, transform_indices = @transform_4, window_bounds = array<i64: 8, 1>}, {pipeline_mode = #tpu.pipeline_mode<synchronous>, transform_indices = @transform_5, window_bounds = array<i64: 8, 72>}, {pipeline_mode = #tpu.pipeline_mode<synchronous>, transform_indices = @transform_6, window_bounds = array<i64: 8, 1>}, {pipeline_mode = #tpu.pipeline_mode<synchronous>, transform_indices = @transform_7, window_bounds = array<i64: 8, 1>}, {transform_indices = @transform_8, window_bounds = array<i64: 1, 8, 288>}]} {
    %c0 = arith.constant 0 : index
    %c0_0 = arith.constant 0 : index
    %c0_1 = arith.constant 0 : index
    %0 = vector.load %arg1[%c0, %c0_0, %c0_1] : memref<1x4x342xf32, #tpu.memory_space<vmem>>, vector<1x4x288xf32>
    %1 = vector.shape_cast %0 : vector<1x4x288xf32> to vector<4x288xf32>
    %c0_2 = arith.constant 0 : index
    %c0_3 = arith.constant 0 : index
    %2 = vector.load %arg11[%c0_2, %c0_3] : memref<36x288xf32, #tpu.memory_space<vmem>>, vector<4x288xf32>
    tpu.vector_store %arg11[%c0_2, %c0_3], %1 {strides = array<i32>} : memref<36x288xf32, #tpu.memory_space<vmem>>, vector<4x288xf32>,
    %c0_4 = arith.constant 0 : index
    %c0_5 = arith.constant 0 : index
    %c1 = arith.constant 1 : index
    %3 = vector.load %arg1[%c0_4, %c0_5, %c1] : memref<1x4x342xf32, #tpu.memory_space<vmem>>, vector<1x4x288xf32>
    %4 = vector.shape_cast %3 : vector<1x4x288xf32> to vector<4x288xf32>
    %c4 = arith.constant 4 : index
    %c0_6 = arith.constant 0 : index
    %5 = vector.load %arg11[%c4, %c0_6] : memref<36x288xf32, #tpu.memory_space<vmem>>, vector<4x288xf32>
    tpu.vector_store %arg11[%c4, %c0_6], %4 {strides = array<i32>} : memref<36x288xf32, #tpu.memory_space<vmem>>, vector<4x288xf32>,
    %c0_7 = arith.constant 0 : index
    %c0_8 = arith.constant 0 : index
    %c2 = arith.constant 2 : index
    %6 = vector.load %arg1[%c0_7, %c0_8, %c2] : memref<1x4x342xf32, #tpu.memory_space<vmem>>, vector<1x4x288xf32>
    %7 = vector.shape_cast %6 : vector<1x4x288xf32> to vector<4x288xf32>
    %c8 = arith.constant 8 : index
    %c0_9 = arith.constant 0 : index
    %8 = vector.load %arg11[%c8, %c0_9] : memref<36x288xf32, #tpu.memory_space<vmem>>, vector<4x288xf32>
    tpu.vector_store %arg11[%c8, %c0_9], %7 {strides = array<i32>} : memref<36x288xf32, #tpu.memory_space<vmem>>, vector<4x288xf32>,
    %c0_10 = arith.constant 0 : index
    %c0_11 = arith.constant 0 : index
    %c18 = arith.constant 18 : index
    %9 = vector.load %arg1[%c0_10, %c0_11, %c18] : memref<1x4x342xf32, #tpu.memory_space<vmem>>, vector<1x4x288xf32>
    %10 = vector.shape_cast %9 : vector<1x4x288xf32> to vector<4x288xf32>
    %c12 = arith.constant 12 : index
    %c0_12 = arith.constant 0 : index
    %11 = vector.load %arg11[%c12, %c0_12] : memref<36x288xf32, #tpu.memory_space<vmem>>, vector<4x288xf32>
    tpu.vector_store %arg11[%c12, %c0_12], %10 {strides = array<i32>} : memref<36x288xf32, #tpu.memory_space<vmem>>, vector<4x288xf32>,
    %c0_13 = arith.constant 0 : index
    %c0_14 = arith.constant 0 : index
    %c19 = arith.constant 19 : index
    %12 = vector.load %arg1[%c0_13, %c0_14, %c19] : memref<1x4x342xf32, #tpu.memory_space<vmem>>, vector<1x4x288xf32>
    %13 = vector.shape_cast %12 : vector<1x4x288xf32> to vector<4x288xf32>
    %c16 = arith.constant 16 : index
    %c0_15 = arith.constant 0 : index
    %14 = vector.load %arg11[%c16, %c0_15] : memref<36x288xf32, #tpu.memory_space<vmem>>, vector<4x288xf32>
    tpu.vector_store %arg11[%c16, %c0_15], %13 {strides = array<i32>} : memref<36x288xf32, #tpu.memory_space<vmem>>, vector<4x288xf32>,
    %c0_16 = arith.constant 0 : index
    %c0_17 = arith.constant 0 : index
    %c20 = arith.constant 20 : index
    %15 = vector.load %arg1[%c0_16, %c0_17, %c20] : memref<1x4x342xf32, #tpu.memory_space<vmem>>, vector<1x4x288xf32>
    %16 = vector.shape_cast %15 : vector<1x4x288xf32> to vector<4x288xf32>
    %c20_18 = arith.constant 20 : index
    %c0_19 = arith.constant 0 : index
    %17 = vector.load %arg11[%c20_18, %c0_19] : memref<36x288xf32, #tpu.memory_space<vmem>>, vector<4x288xf32>
    tpu.vector_store %arg11[%c20_18, %c0_19], %16 {strides = array<i32>} : memref<36x288xf32, #tpu.memory_space<vmem>>, vector<4x288xf32>,
    %c0_20 = arith.constant 0 : index
    %c0_21 = arith.constant 0 : index
    %c36 = arith.constant 36 : index
    %18 = vector.load %arg1[%c0_20, %c0_21, %c36] : memref<1x4x342xf32, #tpu.memory_space<vmem>>, vector<1x4x288xf32>
    %19 = vector.shape_cast %18 : vector<1x4x288xf32> to vector<4x288xf32>
    %c24 = arith.constant 24 : index
    %c0_22 = arith.constant 0 : index
    %20 = vector.load %arg11[%c24, %c0_22] : memref<36x288xf32, #tpu.memory_space<vmem>>, vector<4x288xf32>
    tpu.vector_store %arg11[%c24, %c0_22], %19 {strides = array<i32>} : memref<36x288xf32, #tpu.memory_space<vmem>>, vector<4x288xf32>,
    %c0_23 = arith.constant 0 : index
    %c0_24 = arith.constant 0 : index
    %c37 = arith.constant 37 : index
    %21 = vector.load %arg1[%c0_23, %c0_24, %c37] : memref<1x4x342xf32, #tpu.memory_space<vmem>>, vector<1x4x288xf32>
    %22 = vector.shape_cast %21 : vector<1x4x288xf32> to vector<4x288xf32>
    %c28 = arith.constant 28 : index
    %c0_25 = arith.constant 0 : index
    %23 = vector.load %arg11[%c28, %c0_25] : memref<36x288xf32, #tpu.memory_space<vmem>>, vector<4x288xf32>
    tpu.vector_store %arg11[%c28, %c0_25], %22 {strides = array<i32>} : memref<36x288xf32, #tpu.memory_space<vmem>>, vector<4x288xf32>,
    %c0_26 = arith.constant 0 : index
    %c0_27 = arith.constant 0 : index
    %c38 = arith.constant 38 : index
    %24 = vector.load %arg1[%c0_26, %c0_27, %c38] : memref<1x4x342xf32, #tpu.memory_space<vmem>>, vector<1x4x288xf32>
    %25 = vector.shape_cast %24 : vector<1x4x288xf32> to vector<4x288xf32>
    %c32 = arith.constant 32 : index
    %c0_28 = arith.constant 0 : index
    %26 = vector.load %arg11[%c32, %c0_28] : memref<36x288xf32, #tpu.memory_space<vmem>>, vector<4x288xf32>
    tpu.vector_store %arg11[%c32, %c0_28], %25 {strides = array<i32>} : memref<36x288xf32, #tpu.memory_space<vmem>>, vector<4x288xf32>,
    %c0_29 = arith.constant 0 : index
    %c0_30 = arith.constant 0 : index
    %27 = vector.load %arg3[%c0_29, %c0_30] : memref<8x36xf32, #tpu.memory_space<vmem>>, vector<8x36xf32>
    %c0_31 = arith.constant 0 : index
    %c0_32 = arith.constant 0 : index
    %28 = vector.load %arg11[%c0_31, %c0_32] : memref<36x288xf32, #tpu.memory_space<vmem>>, vector<36x288xf32>
    %cst = arith.constant dense<0.000000e+00> : vector<8x288xf32>
    %29 = tpu.matmul %27, %28, %cst {dimension_numbers = #tpu.dot_dimension_numbers<[1], [0], [0], [1], [0, 0, 1, 1], [], []>} : vector<8x36xf32>, vector<36x288xf32>, vector<8x288xf32> -> vector<8x288xf32>
    %c0_33 = arith.constant 0 : index
    %c0_34 = arith.constant 0 : index
    %30 = vector.load %arg4[%c0_33, %c0_34] : memref<8x1xf32, #tpu.memory_space<vmem>>, vector<8x1xf32>
    %31 = vector.broadcast %30 : vector<8x1xf32> to vector<8x288xf32>
    %32 = arith.mulf %29, %31 : vector<8x288xf32>
    %c0_35 = arith.constant 0 : index
    %c0_36 = arith.constant 0 : index
    %33 = vector.load %arg5[%c0_35, %c0_36] : memref<8x1xf32, #tpu.memory_space<vmem>>, vector<8x1xf32>
    %34 = vector.broadcast %33 : vector<8x1xf32> to vector<8x288xf32>
    %35 = arith.addf %32, %34 : vector<8x288xf32>
    %cst_37 = arith.constant 0.000000e+00 : f32
    %36 = vector.broadcast %cst_37 : f32 to vector<8x288xf32>
    %37 = arith.maximumf %35, %36 : vector<8x288xf32>
    %c0_38 = arith.constant 0 : index
    %c0_39 = arith.constant 0 : index
    %38 = vector.load %arg2[%c0_38, %c0_39] : memref<1x288xf32, #tpu.memory_space<vmem>>, vector<1x288xf32>
    %39 = vector.broadcast %38 : vector<1x288xf32> to vector<8x288xf32>
    %40 = arith.mulf %37, %39 : vector<8x288xf32>
    %cst_40 = arith.constant 0.000000e+00 : f32
    %41 = vector.broadcast %cst_40 : f32 to vector<8x19xf32>
    %c0_41 = arith.constant 0 : index
    %c0_42 = arith.constant 0 : index
    %42 = vector.load %arg10[%c0_41, %c0_42] : memref<8x342xf32, #tpu.memory_space<vmem>>, vector<8x19xf32>
    tpu.vector_store %arg10[%c0_41, %c0_42], %41 {strides = array<i32>} : memref<8x342xf32, #tpu.memory_space<vmem>>, vector<8x19xf32>,
    %cst_43 = arith.constant 0.000000e+00 : f32
    %43 = vector.broadcast %cst_43 : f32 to vector<8x35xf32>
    %c0_44 = arith.constant 0 : index
    %c307 = arith.constant 307 : index
    %44 = vector.load %arg10[%c0_44, %c307] : memref<8x342xf32, #tpu.memory_space<vmem>>, vector<8x35xf32>
    tpu.vector_store %arg10[%c0_44, %c307], %43 {strides = array<i32>} : memref<8x342xf32, #tpu.memory_space<vmem>>, vector<8x35xf32>,
    %c0_45 = arith.constant 0 : index
    %c19_46 = arith.constant 19 : index
    %45 = vector.load %arg10[%c0_45, %c19_46] : memref<8x342xf32, #tpu.memory_space<vmem>>, vector<8x288xf32>
    tpu.vector_store %arg10[%c0_45, %c19_46], %40 {strides = array<i32>} : memref<8x342xf32, #tpu.memory_space<vmem>>, vector<8x288xf32>,
    %c0_47 = arith.constant 0 : index
    %c0_48 = arith.constant 0 : index
    %46 = vector.load %arg10[%c0_47, %c0_48] : memref<8x342xf32, #tpu.memory_space<vmem>>, vector<8x288xf32>
    %c0_49 = arith.constant 0 : index
    %c0_50 = arith.constant 0 : index
    %47 = vector.load %arg12[%c0_49, %c0_50] : memref<72x288xf32, #tpu.memory_space<vmem>>, vector<8x288xf32>
    tpu.vector_store %arg12[%c0_49, %c0_50], %46 {strides = array<i32>} : memref<72x288xf32, #tpu.memory_space<vmem>>, vector<8x288xf32>,
    %c0_51 = arith.constant 0 : index
    %c1_52 = arith.constant 1 : index
    %48 = vector.load %arg10[%c0_51, %c1_52] : memref<8x342xf32, #tpu.memory_space<vmem>>, vector<8x288xf32>
    %c8_53 = arith.constant 8 : index
    %c0_54 = arith.constant 0 : index
    %49 = vector.load %arg12[%c8_53, %c0_54] : memref<72x288xf32, #tpu.memory_space<vmem>>, vector<8x288xf32>
    tpu.vector_store %arg12[%c8_53, %c0_54], %48 {strides = array<i32>} : memref<72x288xf32, #tpu.memory_space<vmem>>, vector<8x288xf32>,
    %c0_55 = arith.constant 0 : index
    %c2_56 = arith.constant 2 : index
    %50 = vector.load %arg10[%c0_55, %c2_56] : memref<8x342xf32, #tpu.memory_space<vmem>>, vector<8x288xf32>
    %c16_57 = arith.constant 16 : index
    %c0_58 = arith.constant 0 : index
    %51 = vector.load %arg12[%c16_57, %c0_58] : memref<72x288xf32, #tpu.memory_space<vmem>>, vector<8x288xf32>
    tpu.vector_store %arg12[%c16_57, %c0_58], %50 {strides = array<i32>} : memref<72x288xf32, #tpu.memory_space<vmem>>, vector<8x288xf32>,
    %c0_59 = arith.constant 0 : index
    %c18_60 = arith.constant 18 : index
    %52 = vector.load %arg10[%c0_59, %c18_60] : memref<8x342xf32, #tpu.memory_space<vmem>>, vector<8x288xf32>
    %c24_61 = arith.constant 24 : index
    %c0_62 = arith.constant 0 : index
    %53 = vector.load %arg12[%c24_61, %c0_62] : memref<72x288xf32, #tpu.memory_space<vmem>>, vector<8x288xf32>
    tpu.vector_store %arg12[%c24_61, %c0_62], %52 {strides = array<i32>} : memref<72x288xf32, #tpu.memory_space<vmem>>, vector<8x288xf32>,
    %c0_63 = arith.constant 0 : index
    %c19_64 = arith.constant 19 : index
    %54 = vector.load %arg10[%c0_63, %c19_64] : memref<8x342xf32, #tpu.memory_space<vmem>>, vector<8x288xf32>
    %c32_65 = arith.constant 32 : index
    %c0_66 = arith.constant 0 : index
    %55 = vector.load %arg12[%c32_65, %c0_66] : memref<72x288xf32, #tpu.memory_space<vmem>>, vector<8x288xf32>
    tpu.vector_store %arg12[%c32_65, %c0_66], %54 {strides = array<i32>} : memref<72x288xf32, #tpu.memory_space<vmem>>, vector<8x288xf32>,
    %c0_67 = arith.constant 0 : index
    %c20_68 = arith.constant 20 : index
    %56 = vector.load %arg10[%c0_67, %c20_68] : memref<8x342xf32, #tpu.memory_space<vmem>>, vector<8x288xf32>
    %c40 = arith.constant 40 : index
    %c0_69 = arith.constant 0 : index
    %57 = vector.load %arg12[%c40, %c0_69] : memref<72x288xf32, #tpu.memory_space<vmem>>, vector<8x288xf32>
    tpu.vector_store %arg12[%c40, %c0_69], %56 {strides = array<i32>} : memref<72x288xf32, #tpu.memory_space<vmem>>, vector<8x288xf32>,
    %c0_70 = arith.constant 0 : index
    %c36_71 = arith.constant 36 : index
    %58 = vector.load %arg10[%c0_70, %c36_71] : memref<8x342xf32, #tpu.memory_space<vmem>>, vector<8x288xf32>
    %c48 = arith.constant 48 : index
    %c0_72 = arith.constant 0 : index
    %59 = vector.load %arg12[%c48, %c0_72] : memref<72x288xf32, #tpu.memory_space<vmem>>, vector<8x288xf32>
    tpu.vector_store %arg12[%c48, %c0_72], %58 {strides = array<i32>} : memref<72x288xf32, #tpu.memory_space<vmem>>, vector<8x288xf32>,
    %c0_73 = arith.constant 0 : index
    %c37_74 = arith.constant 37 : index
    %60 = vector.load %arg10[%c0_73, %c37_74] : memref<8x342xf32, #tpu.memory_space<vmem>>, vector<8x288xf32>
    %c56 = arith.constant 56 : index
    %c0_75 = arith.constant 0 : index
    %61 = vector.load %arg12[%c56, %c0_75] : memref<72x288xf32, #tpu.memory_space<vmem>>, vector<8x288xf32>
    tpu.vector_store %arg12[%c56, %c0_75], %60 {strides = array<i32>} : memref<72x288xf32, #tpu.memory_space<vmem>>, vector<8x288xf32>,
    %c0_76 = arith.constant 0 : index
    %c38_77 = arith.constant 38 : index
    %62 = vector.load %arg10[%c0_76, %c38_77] : memref<8x342xf32, #tpu.memory_space<vmem>>, vector<8x288xf32>
    %c64 = arith.constant 64 : index
    %c0_78 = arith.constant 0 : index
    %63 = vector.load %arg12[%c64, %c0_78] : memref<72x288xf32, #tpu.memory_space<vmem>>, vector<8x288xf32>
    tpu.vector_store %arg12[%c64, %c0_78], %62 {strides = array<i32>} : memref<72x288xf32, #tpu.memory_space<vmem>>, vector<8x288xf32>,
    %c0_79 = arith.constant 0 : index
    %c0_80 = arith.constant 0 : index
    %64 = vector.load %arg6[%c0_79, %c0_80] : memref<8x72xf32, #tpu.memory_space<vmem>>, vector<8x72xf32>
    %c0_81 = arith.constant 0 : index
    %c0_82 = arith.constant 0 : index
    %65 = vector.load %arg12[%c0_81, %c0_82] : memref<72x288xf32, #tpu.memory_space<vmem>>, vector<72x288xf32>
    %cst_83 = arith.constant dense<0.000000e+00> : vector<8x288xf32>
    %66 = tpu.matmul %64, %65, %cst_83 {dimension_numbers = #tpu.dot_dimension_numbers<[1], [0], [0], [1], [0, 0, 1, 1], [], []>} : vector<8x72xf32>, vector<72x288xf32>, vector<8x288xf32> -> vector<8x288xf32>
    %c0_84 = arith.constant 0 : index
    %c0_85 = arith.constant 0 : index
    %67 = vector.load %arg7[%c0_84, %c0_85] : memref<8x1xf32, #tpu.memory_space<vmem>>, vector<8x1xf32>
    %68 = vector.broadcast %67 : vector<8x1xf32> to vector<8x288xf32>
    %69 = arith.mulf %66, %68 : vector<8x288xf32>
    %c0_86 = arith.constant 0 : index
    %c0_87 = arith.constant 0 : index
    %70 = vector.load %arg8[%c0_86, %c0_87] : memref<8x1xf32, #tpu.memory_space<vmem>>, vector<8x1xf32>
    %71 = vector.broadcast %70 : vector<8x1xf32> to vector<8x288xf32>
    %72 = arith.addf %69, %71 : vector<8x288xf32>
    %cst_88 = arith.constant 0.000000e+00 : f32
    %73 = vector.broadcast %cst_88 : f32 to vector<8x288xf32>
    %74 = arith.maximumf %72, %73 : vector<8x288xf32>
    %c0_89 = arith.constant 0 : index
    %c0_90 = arith.constant 0 : index
    %c0_91 = arith.constant 0 : index
    %75 = vector.load %arg9[%c0_89, %c0_90, %c0_91] : memref<1x8x288xf32, #tpu.memory_space<vmem>>, vector<1x8x288xf32>
    %76 = vector.shape_cast %75 : vector<1x8x288xf32> to vector<8x288xf32>
    %77 = vector.shape_cast %74 : vector<8x288xf32> to vector<1x8x288xf32>
    tpu.vector_store %arg9[%c0_89, %c0_90, %c0_91], %77 {strides = array<i32>} : memref<1x8x288xf32, #tpu.memory_space<vmem>>, vector<1x8x288xf32>,
    return
  }
  func.func @transform_0(%arg0: i32) -> (i32, i32, i32) {
    %c0_i32 = arith.constant 0 : i32
    %c0_i32_0 = arith.constant 0 : i32
    %c0_i32_1 = arith.constant 0 : i32
    return %arg0, %c0_i32, %c0_i32_0 : i32, i32, i32
  }
  func.func @transform_1(%arg0: i32) -> (i32, i32) {
    %c0_i32 = arith.constant 0 : i32
    %c0_i32_0 = arith.constant 0 : i32
    %c0_i32_1 = arith.constant 0 : i32
    return %c0_i32, %c0_i32_0 : i32, i32
  }
  func.func @transform_2(%arg0: i32) -> (i32, i32) {
    %c0_i32 = arith.constant 0 : i32
    %c0_i32_0 = arith.constant 0 : i32
    %c0_i32_1 = arith.constant 0 : i32
    return %c0_i32, %c0_i32_0 : i32, i32
  }
  func.func @transform_3(%arg0: i32) -> (i32, i32) {
    %c0_i32 = arith.constant 0 : i32
    %c0_i32_0 = arith.constant 0 : i32
    %c0_i32_1 = arith.constant 0 : i32
    return %c0_i32, %c0_i32_0 : i32, i32
  }
  func.func @transform_4(%arg0: i32) -> (i32, i32) {
    %c0_i32 = arith.constant 0 : i32
    %c0_i32_0 = arith.constant 0 : i32
    %c0_i32_1 = arith.constant 0 : i32
    return %c0_i32, %c0_i32_0 : i32, i32
  }
  func.func @transform_5(%arg0: i32) -> (i32, i32) {
    %c0_i32 = arith.constant 0 : i32
    %c0_i32_0 = arith.constant 0 : i32
    %c0_i32_1 = arith.constant 0 : i32
    return %c0_i32, %c0_i32_0 : i32, i32
  }
  func.func @transform_6(%arg0: i32) -> (i32, i32) {
    %c0_i32 = arith.constant 0 : i32
    %c0_i32_0 = arith.constant 0 : i32
    %c0_i32_1 = arith.constant 0 : i32
    return %c0_i32, %c0_i32_0 : i32, i32
  }
  func.func @transform_7(%arg0: i32) -> (i32, i32) {
    %c0_i32 = arith.constant 0 : i32
    %c0_i32_0 = arith.constant 0 : i32
    %c0_i32_1 = arith.constant 0 : i32
    return %c0_i32, %c0_i32_0 : i32, i32
  }
  func.func @transform_8(%arg0: i32) -> (i32, i32, i32) {
    %c0_i32 = arith.constant 0 : i32
    %c0_i32_0 = arith.constant 0 : i32
    %c0_i32_1 = arith.constant 0 : i32
    return %arg0, %c0_i32, %c0_i32_0 : i32, i32, i32
  }
}

</mosaic_0001>

<llo_original>
// kernel: tile.8
$region0: #{tile.8}
  #allocation0 [shape = 's32[1]{0}', space=sflag, size = 0x4, scoped, tag = 'scoped memory for tile.8']
  %s0 = inlined_call_operand.vmem [shape: f32[18], index: 0, kind: input, shape index: {}]
  %s1 = inlined_call_operand.vmem [shape: f32[16,18], index: 1, kind: output, shape index: {}]
  // Predicated region
  $region2: #{tile.8} parent=0 // pred_check
    _
  $region3: #{tile.8} parent=0 // pred_check_branch
    %3 = sbr.rel (0) target = $region5
  $region4: #{tile.8} parent=0 // pred_region
    _
  $region5: #{tile.8} parent=0 // pred_fallthru
    _
  %v4 = vld [vmem:[%s0] ss:$0 sm:$0xff]
  %5 = vst [vmem:[%s1] sm:$0xff] %v4
  %s6 = scalar_lea.vmem %s1, 8
  %7 = vst [vmem:[%s6] sm:$0xff] %v4

// kernel: tile.9
$region0: #{tile.9}
  %s0 = inlined_call_operand.vmem [shape: f32[16,18], index: 0, kind: input, shape index: {}]
  %s1 = inlined_call_operand.vmem [shape: f32[1,288], index: 1, kind: output, shape index: {}]
  $region1: #{tile.9} parent=0
    #allocation0 [shape = 'u8[12288]{0}', space=vmem, size = 0x3000, scoped, tag = 'scoped mem for output reshape']
    %v2 = vld [vmem:[%s0] sm:$0x1]
    %vm3 = vcmask 146432
    %4 = vst.msk [vmem:[#allocation0] sm:$0x1] %vm3, %v2
    %s5 = scalar_lea.vmem %s0, 7
    %v6 = vld [vmem:[%s5] sm:$0x1]
    %s7 = scalar_lea.vmem %s0, 7
    %v8 = vld [vmem:[%s7] sm:$0x1]
    %vm9 = vcmask 15360
    %v10 = vsel %vm9, %v8, %v6
    %11 = vrot.lane.b32.xlu0 %v10, 126
    %v12 = vpop.permute.xlu0 %11
    %vm13 = vcmask 130048
    %s14 = scalar_lea.vmem [#allocation0], 8
    %15 = vst.msk [vmem:[%s14] sm:$0x1] %vm13, %v12
    %vm16 = vcmask 1048560
    %17 = vst.msk [vmem:[#allocation0] sm:$0x1] %vm16, %v12
    %s18 = scalar_lea.vmem %s0, 14
    %v19 = vld [vmem:[%s18] sm:$0x1]
    %s20 = scalar_lea.vmem %s0, 14
    %v21 = vld [vmem:[%s20] sm:$0x1]
    %vm22 = vcmask 31744
    %v23 = vsel %vm22, %v21, %v19
    %24 = vrot.lane.b32.xlu0 %v23, 124
    %v25 = vpop.permute.xlu0 %24
    %vm26 = vcmask 113664
    %s27 = scalar_lea.vmem [#allocation0], 16
    %28 = vst.msk [vmem:[%s27] sm:$0x1] %vm26, %v25
    %vm29 = vcmask 1048544
    %s30 = scalar_lea.vmem [#allocation0], 8
    %31 = vst.msk [vmem:[%s30] sm:$0x1] %vm29, %v25
    %s32 = scalar_lea.vmem %s0, 6
    %v33 = vld [vmem:[%s32] sm:$0x1]
    %34 = vrot.lane.b32.xlu0 %v33, 108
    %v35 = vpop.permute.xlu0 %34
    %vm36 = vcmask 1032032
    %37 = vst.msk [vmem:[#allocation0] sm:$0x1] %vm36, %v35
    %s38 = scalar_lea.vmem %s0, 13
    %v39 = vld [vmem:[%s38] sm:$0x1]
    %40 = vrot.lane.b32.xlu0 %v39, 106
    %v41 = vpop.permute.xlu0 %40
    %vm42 = vcmask 1015632
    %s43 = scalar_lea.vmem [#allocation0], 8
    %44 = vst.msk [vmem:[%s43] sm:$0x1] %vm42, %v41
    %s45 = scalar_lea.vmem %s0, 5
    %v46 = vld [vmem:[%s45] sm:$0x1]
    %47 = vrot.lane.b32.xlu0 %v46, 90
    %v48 = vpop.permute.xlu0 %47
    %vm49 = vcmask 884432
    %50 = vst.msk [vmem:[#allocation0] sm:$0x1] %vm49, %v48
    %s51 = scalar_lea.vmem %s0, 12
    %v52 = vld [vmem:[%s51] sm:$0x1]
    %53 = vrot.lane.b32.xlu0 %v52, 88
    %v54 = vpop.permute.xlu0 %53
    %vm55 = vcmask 868032
    %s56 = scalar_lea.vmem [#allocation0], 8
    %57 = vst.msk [vmem:[%s56] sm:$0x1] %vm55, %v54
    %s58 = scalar_lea.vmem %s0, 4
    %v59 = vld [vmem:[%s58] sm:$0x1]
    %60 = vrot.lane.b32.xlu0 %v59, 72
    %v61 = vpop.permute.xlu0 %60
    %vm62 = vcmask 736832
    %63 = vst.msk [vmem:[#allocation0] sm:$0x1] %vm62, %v61
    %s64 = scalar_lea.vmem %s0, 11
    %v65 = vld [vmem:[%s64] sm:$0x1]
    %66 = vrot.lane.b32.xlu0 %v65, 70
    %v67 = vpop.permute.xlu0 %66
    %vm68 = vcmask 720432
    %s69 = scalar_lea.vmem [#allocation0], 8
    %70 = vst.msk [vmem:[%s69] sm:$0x1] %vm68, %v67
    %s71 = scalar_lea.vmem %s0, 3
    %v72 = vld [vmem:[%s71] sm:$0x1]
    %73 = vrot.lane.b32.xlu0 %v72, 54
    %v74 = vpop.permute.xlu0 %73
    %vm75 = vcmask 589232
    %76 = vst.msk [vmem:[#allocation0] sm:$0x1] %vm75, %v74
    %s77 = scalar_lea.vmem %s0, 10
    %v78 = vld [vmem:[%s77] sm:$0x1]
    %79 = vrot.lane.b32.xlu0 %v78, 52
    %v80 = vpop.permute.xlu0 %79
    %vm81 = vcmask 572832
    %s82 = scalar_lea.vmem [#allocation0], 8
    %83 = vst.msk [vmem:[%s82] sm:$0x1] %vm81, %v80
    %s84 = scalar_lea.vmem %s0, 2
    %v85 = vld [vmem:[%s84] sm:$0x1]
    %86 = vrot.lane.b32.xlu0 %v85, 36
    %v87 = vpop.permute.xlu0 %86
    %vm88 = vcmask 441632
    %89 = vst.msk [vmem:[#allocation0] sm:$0x1] %vm88, %v87
    %s90 = scalar_lea.vmem %s0, 9
    %v91 = vld [vmem:[%s90] sm:$0x1]
    %92 = vrot.lane.b32.xlu0 %v91, 34
    %v93 = vpop.permute.xlu0 %92
    %vm94 = vcmask 425232
    %s95 = scalar_lea.vmem [#allocation0], 8
    %96 = vst.msk [vmem:[%s95] sm:$0x1] %vm94, %v93
    %s97 = scalar_lea.vmem %s0, 1
    %v98 = vld [vmem:[%s97] sm:$0x1]
    %99 = vrot.lane.b32.xlu0 %v98, 18
    %v100 = vpop.permute.xlu0 %99
    %vm101 = vcmask 294032
    %102 = vst.msk [vmem:[#allocation0] sm:$0x1] %vm101, %v100
    %s103 = scalar_lea.vmem %s0, 8
    %v104 = vld [vmem:[%s103] sm:$0x1]
    %105 = vrot.lane.b32.xlu0 %v104, 16
    %v106 = vpop.permute.xlu0 %105
    %vm107 = vcmask 277632
    %s108 = scalar_lea.vmem [#allocation0], 8
    %109 = vst.msk [vmem:[%s108] sm:$0x1] %vm107, %v106
    %s110 = scalar_lea.vmem %s0, 15
    %v111 = vld [vmem:[%s110] sm:$0x1]
    %112 = vrot.lane.b32.xlu0 %v111, 14
    %v113 = vpop.permute.xlu0 %112
    %vm114 = vcmask 261232
    %s115 = scalar_lea.vmem [#allocation0], 16
    %116 = vst.msk [vmem:[%s115] sm:$0x1] %vm114, %v113
    %s118 = ssub.s32 2, 1
    %v119 = vld [vmem:[#allocation0] sm:%s118]
    %s121 = ssub.s32 2, 1
    %122 = vst [vmem:[%s1] sm:%s121] %v119
    %s123 = scalar_lea.vmem [#allocation0], 8
    %v124 = vld [vmem:[%s123] sm:%s118]
    %s126 = ssub.s32 2, 1
    %s127 = scalar_lea.vmem %s1, 1
    %128 = vst [vmem:[%s127] sm:%s126] %v124
    %s129 = scalar_lea.vmem [#allocation0], 16
    %v130 = vld [vmem:[%s129] sm:%s118]
    %s132 = ssub.s32 2, 1
    %s133 = scalar_lea.vmem %s1, 2
    %134 = vst [vmem:[%s133] sm:%s132] %v130

// kernel: double_conv2d.1
$region0: #{double_conv2d.1}
  #allocation0 [shape = 'u32[]', space=smem, size = 0x4, offset = 0x4, fixed_abs, tag = 'smem constant byte address 0x4 - core index']
  #allocation1 [shape = 'u32[72,128]{1,0:T(1,128)}', space=vmem, size = 0x9000, scoped, tag = 'internal scratch']
  #allocation2 [shape = 'f32[8,342]{1,0:T(8,128)}', space=vmem, size = 0x3000, scoped, tag = 'scratch operand']
  #allocation3 [shape = 'f32[36,288]{1,0:T(8,128)}', space=vmem, size = 0xf000, scoped, tag = 'scratch operand']
  #allocation4 [shape = 'f32[72,288]{1,0:T(8,128)}', space=vmem, size = 0x1b000, scoped, tag = 'scratch operand']
  %s0 = inlined_call_operand.vmem [shape: f32[2,4,342], index: 0, kind: input, shape index: {}]
  %s1 = inlined_call_operand.vmem [shape: f32[1,288], index: 1, kind: input, shape index: {}]
  %s2 = inlined_call_operand.vmem [shape: f32[8,36], index: 2, kind: input, shape index: {}]
  %s3 = inlined_call_operand.vmem [shape: f32[8,1], index: 3, kind: input, shape index: {}]
  %s4 = inlined_call_operand.vmem [shape: f32[8,1], index: 4, kind: input, shape index: {}]
  %s5 = inlined_call_operand.vmem [shape: f32[8,72], index: 5, kind: input, shape index: {}]
  %s6 = inlined_call_operand.vmem [shape: f32[8,1], index: 6, kind: input, shape index: {}]
  %s7 = inlined_call_operand.vmem [shape: f32[8,1], index: 7, kind: input, shape index: {}]
  %s8 = inlined_call_operand.vmem [shape: f32[2,8,288], index: 8, kind: output, shape index: {}]
  %s9 = sld [smem:[#allocation0]]
  $region65: #{double_conv2d.1} parent=0
    _
  %s11 = ssub.s32 1, %s9
  %s12 = scalar_select 0, %s11, %s9
  loop: start=0, step=1, limit=4
  $region2: #{double_conv2d.1} parent=0 // loop_pre_header
    _
  $region3: #{double_conv2d.1} parent=0 // loop_header
    %s14 = sphi 0, %s18
    %p15 = scmp.ge.s32.totalorder %s14, 4
    %s24 = sphi 0, %s26
    %s27 = sphi 0, %s24
    %s28 = sphi 0, %s27
    %s44 = sphi 0, %s28
    %s48 = sphi 0, %s48
    %s50 = sphi 0, %s48
    %s51 = sphi 0, %s50
    %s65 = sphi 0, %s51
    %s69 = sphi 0, %s69
    %s71 = sphi 0, %s69
    %s72 = sphi 0, %s71
    %s86 = sphi 0, %s72
    %s90 = sphi 0, %s90
    %s92 = sphi 0, %s90
    %s93 = sphi 0, %s92
    %s107 = sphi 0, %s93
    %s111 = sphi 0, %s111
    %s113 = sphi 0, %s111
    %s114 = sphi 0, %s113
    %s128 = sphi 0, %s114
    %s132 = sphi 0, %s132
    %s134 = sphi 0, %s132
    %s135 = sphi 0, %s134
    %s149 = sphi 0, %s135
    %s153 = sphi 0, %s153
    %s155 = sphi 0, %s153
    %s156 = sphi 0, %s155
    %s170 = sphi 0, %s156
    %s174 = sphi 0, %s174
    %s176 = sphi 0, %s174
    %s177 = sphi 0, %s176
    %s191 = sphi 0, %s177
    %s197 = sphi 0, %s199
    %s200 = sphi 0, %s197
    %s201 = sphi 0, %s200
    %s217 = sphi 0, %s201
  $region4: #{double_conv2d.1} parent=0 // loop_header_branch
    %17 = sbr.rel (%p15) target = $region8
  $region5: #{double_conv2d.1} parent=0 // loop_body
    %s19 = ssub.s32 %s14, 1
    %s20 = ssub.s32 %s14, 2
    %s21 = sadd.s32 %s14, 1
    %s22 = ssub.s32 %s14, %s21
    %p23 = scmp.eq.s32.totalorder %s22, 0
    %s25 = sadd.s32 %s24, 1
    %s26 = scalar_select %p23, %s24, %s25
    %p29 = pneg %p23
    %p30 = scmp.eq.s32.totalorder %s14, 1
    %p31 = por %p29, %p30
    %p32 = scmp.ne.s32.totalorder %s24, %s27
    %p33 = scmp.eq.s32.totalorder %s14, 0
    %p34 = por %p32, %p33
    %p35 = scmp.ne.s32.totalorder %s24, %s27
    %p36 = scmp.eq.s32.totalorder %s19, 1
    %p37 = por %p35, %p36
    %p38 = scmp.ne.s32.totalorder %s27, %s28
    %p39 = scmp.eq.s32.totalorder %s19, 0
    %p40 = por %p38, %p39
    %p41 = scmp.ne.s32.totalorder %s27, %s28
    %p42 = scmp.eq.s32.totalorder %s20, 1
    %p43 = por %p41, %p42
    %p45 = scmp.ne.s32.totalorder %s28, %s44
    %p46 = scmp.eq.s32.totalorder %s20, 0
    %p47 = por %p45, %p46
    %s49 = sadd.s32 %s48, 1
    %p52 = scmp.eq.s32.totalorder %s14, 1
    %p53 = scmp.ne.s32.totalorder %s48, %s50
    %p54 = scmp.eq.s32.totalorder %s14, 0
    %p55 = por %p53, %p54
    %p56 = scmp.ne.s32.totalorder %s48, %s50
    %p57 = scmp.eq.s32.totalorder %s19, 1
    %p58 = por %p56, %p57
    %p59 = scmp.ne.s32.totalorder %s50, %s51
    %p60 = scmp.eq.s32.totalorder %s19, 0
    %p61 = por %p59, %p60
    %p62 = scmp.ne.s32.totalorder %s50, %s51
    %p63 = scmp.eq.s32.totalorder %s20, 1
    %p64 = por %p62, %p63
    %p66 = scmp.ne.s32.totalorder %s51, %s65
    %p67 = scmp.eq.s32.totalorder %s20, 0
    %p68 = por %p66, %p67
    %s70 = sadd.s32 %s69, 1
    %p73 = scmp.eq.s32.totalorder %s14, 1
    %p74 = scmp.ne.s32.totalorder %s69, %s71
    %p75 = scmp.eq.s32.totalorder %s14, 0
    %p76 = por %p74, %p75
    %p77 = scmp.ne.s32.totalorder %s69, %s71
    %p78 = scmp.eq.s32.totalorder %s19, 1
    %p79 = por %p77, %p78
    %p80 = scmp.ne.s32.totalorder %s71, %s72
    %p81 = scmp.eq.s32.totalorder %s19, 0
    %p82 = por %p80, %p81
    %p83 = scmp.ne.s32.totalorder %s71, %s72
    %p84 = scmp.eq.s32.totalorder %s20, 1
    %p85 = por %p83, %p84
    %p87 = scmp.ne.s32.totalorder %s72, %s86
    %p88 = scmp.eq.s32.totalorder %s20, 0
    %p89 = por %p87, %p88
    %s91 = sadd.s32 %s90, 1
    %p94 = scmp.eq.s32.totalorder %s14, 1
    %p95 = scmp.ne.s32.totalorder %s90, %s92
    %p96 = scmp.eq.s32.totalorder %s14, 0
    %p97 = por %p95, %p96
    %p98 = scmp.ne.s32.totalorder %s90, %s92
    %p99 = scmp.eq.s32.totalorder %s19, 1
    %p100 = por %p98, %p99
    %p101 = scmp.ne.s32.totalorder %s92, %s93
    %p102 = scmp.eq.s32.totalorder %s19, 0
    %p103 = por %p101, %p102
    %p104 = scmp.ne.s32.totalorder %s92, %s93
    %p105 = scmp.eq.s32.totalorder %s20, 1
    %p106 = por %p104, %p105
    %p108 = scmp.ne.s32.totalorder %s93, %s107
    %p109 = scmp.eq.s32.totalorder %s20, 0
    %p110 = por %p108, %p109
    %s112 = sadd.s32 %s111, 1
    %p115 = scmp.eq.s32.totalorder %s14, 1
    %p116 = scmp.ne.s32.totalorder %s111, %s113
    %p117 = scmp.eq.s32.totalorder %s14, 0
    %p118 = por %p116, %p117
    %p119 = scmp.ne.s32.totalorder %s111, %s113
    %p120 = scmp.eq.s32.totalorder %s19, 1
    %p121 = por %p119, %p120
    %p122 = scmp.ne.s32.totalorder %s113, %s114
    %p123 = scmp.eq.s32.totalorder %s19, 0
    %p124 = por %p122, %p123
    %p125 = scmp.ne.s32.totalorder %s113, %s114
    %p126 = scmp.eq.s32.totalorder %s20, 1
    %p127 = por %p125, %p126
    %p129 = scmp.ne.s32.totalorder %s114, %s128
    %p130 = scmp.eq.s32.totalorder %s20, 0
    %p131 = por %p129, %p130
    %s133 = sadd.s32 %s132, 1
    %p136 = scmp.eq.s32.totalorder %s14, 1
    %p137 = scmp.ne.s32.totalorder %s132, %s134
    %p138 = scmp.eq.s32.totalorder %s14, 0
    %p139 = por %p137, %p138
    %p140 = scmp.ne.s32.totalorder %s132, %s134
    %p141 = scmp.eq.s32.totalorder %s19, 1
    %p142 = por %p140, %p141
    %p143 = scmp.ne.s32.totalorder %s134, %s135
    %p144 = scmp.eq.s32.totalorder %s19, 0
    %p145 = por %p143, %p144
    %p146 = scmp.ne.s32.totalorder %s134, %s135
    %p147 = scmp.eq.s32.totalorder %s20, 1
    %p148 = por %p146, %p147
    %p150 = scmp.ne.s32.totalorder %s135, %s149
    %p151 = scmp.eq.s32.totalorder %s20, 0
    %p152 = por %p150, %p151
    %s154 = sadd.s32 %s153, 1
    %p157 = scmp.eq.s32.totalorder %s14, 1
    %p158 = scmp.ne.s32.totalorder %s153, %s155
    %p159 = scmp.eq.s32.totalorder %s14, 0
    %p160 = por %p158, %p159
    %p161 = scmp.ne.s32.totalorder %s153, %s155
    %p162 = scmp.eq.s32.totalorder %s19, 1
    %p163 = por %p161, %p162
    %p164 = scmp.ne.s32.totalorder %s155, %s156
    %p165 = scmp.eq.s32.totalorder %s19, 0
    %p166 = por %p164, %p165
    %p167 = scmp.ne.s32.totalorder %s155, %s156
    %p168 = scmp.eq.s32.totalorder %s20, 1
    %p169 = por %p167, %p168
    %p171 = scmp.ne.s32.totalorder %s156, %s170
    %p172 = scmp.eq.s32.totalorder %s20, 0
    %p173 = por %p171, %p172
    %s175 = sadd.s32 %s174, 1
    %p178 = scmp.eq.s32.totalorder %s14, 1
    %p179 = scmp.ne.s32.totalorder %s174, %s176
    %p180 = scmp.eq.s32.totalorder %s14, 0
    %p181 = por %p179, %p180
    %p182 = scmp.ne.s32.totalorder %s174, %s176
    %p183 = scmp.eq.s32.totalorder %s19, 1
    %p184 = por %p182, %p183
    %p185 = scmp.ne.s32.totalorder %s176, %s177
    %p186 = scmp.eq.s32.totalorder %s19, 0
    %p187 = por %p185, %p186
    %p188 = scmp.ne.s32.totalorder %s176, %s177
    %p189 = scmp.eq.s32.totalorder %s20, 1
    %p190 = por %p188, %p189
    %p192 = scmp.ne.s32.totalorder %s177, %s191
    %p193 = scmp.eq.s32.totalorder %s20, 0
    %p194 = por %p192, %p193
    %s195 = ssub.s32 %s14, %s21
    %p196 = scmp.eq.s32.totalorder %s195, 0
    %s198 = sadd.s32 %s197, 1
    %s199 = scalar_select %p196, %s197, %s198
    %p202 = pneg %p196
    %p203 = scmp.eq.s32.totalorder %s14, 1
    %p204 = por %p202, %p203
    %p205 = scmp.ne.s32.totalorder %s197, %s200
    %p206 = scmp.eq.s32.totalorder %s14, 0
    %p207 = por %p205, %p206
    %p208 = scmp.ne.s32.totalorder %s197, %s200
    %p209 = scmp.eq.s32.totalorder %s19, 1
    %p210 = por %p208, %p209
    %p211 = scmp.ne.s32.totalorder %s200, %s201
    %p212 = scmp.eq.s32.totalorder %s19, 0
    %p213 = por %p211, %p212
    %p214 = scmp.ne.s32.totalorder %s200, %s201
    %p215 = scmp.eq.s32.totalorder %s20, 1
    %p216 = por %p214, %p215
    %p218 = scmp.ne.s32.totalorder %s201, %s217
    %p219 = scmp.eq.s32.totalorder %s20, 0
    %p220 = por %p218, %p219
    %p221 = scmp.le.s32.totalorder 1, %s14
    %p222 = scmp.lt.s32.totalorder %s14, 3
    %p223 = pnand %p221, %p222
    %p224 = pneg %p223
    // Predicated region
    $region9: #{double_conv2d.1} parent=5 // pred_check
      _
    $region10: #{double_conv2d.1} parent=5 // pred_check_branch
      %226 = sbr.rel (%p223) target = $region12
    $region11: #{double_conv2d.1} parent=5 // pred_region
      %s227 = ssub.s32 %s14, 1
      // Predicated region
      $region13: #{double_conv2d.1} parent=11 // pred_check
        %p228 = pneg %p61
      $region14: #{double_conv2d.1} parent=11 // pred_check_branch
        %230 = sbr.rel (%p228) target = $region16
      $region15: #{double_conv2d.1} parent=11 // pred_region
        _
      $region16: #{double_conv2d.1} parent=11 // pred_fallthru
        _
      // Predicated region
      $region17: #{double_conv2d.1} parent=11 // pred_check
        %p231 = pneg %p82
      $region18: #{double_conv2d.1} parent=11 // pred_check_branch
        %233 = sbr.rel (%p231) target = $region20
      $region19: #{double_conv2d.1} parent=11 // pred_region
        _
      $region20: #{double_conv2d.1} parent=11 // pred_fallthru
        _
      // Predicated region
      $region21: #{double_conv2d.1} parent=11 // pred_check
        %p234 = pneg %p103
      $region22: #{double_conv2d.1} parent=11 // pred_check_branch
        %236 = sbr.rel (%p234) target = $region24
      $region23: #{double_conv2d.1} parent=11 // pred_region
        _
      $region24: #{double_conv2d.1} parent=11 // pred_fallthru
        _
      // Predicated region
      $region25: #{double_conv2d.1} parent=11 // pred_check
        %p237 = pneg %p124
      $region26: #{double_conv2d.1} parent=11 // pred_check_branch
        %239 = sbr.rel (%p237) target = $region28
      $region27: #{double_conv2d.1} parent=11 // pred_region
        _
      $region28: #{double_conv2d.1} parent=11 // pred_fallthru
        _
      // Predicated region
      $region29: #{double_conv2d.1} parent=11 // pred_check
        %p240 = pneg %p145
      $region30: #{double_conv2d.1} parent=11 // pred_check_branch
        %242 = sbr.rel (%p240) target = $region32
      $region31: #{double_conv2d.1} parent=11 // pred_region
        _
      $region32: #{double_conv2d.1} parent=11 // pred_fallthru
        _
      // Predicated region
      $region33: #{double_conv2d.1} parent=11 // pred_check
        %p243 = pneg %p166
      $region34: #{double_conv2d.1} parent=11 // pred_check_branch
        %245 = sbr.rel (%p243) target = $region36
      $region35: #{double_conv2d.1} parent=11 // pred_region
        _
      $region36: #{double_conv2d.1} parent=11 // pred_fallthru
        _
      // Predicated region
      $region37: #{double_conv2d.1} parent=11 // pred_check
        %p246 = pneg %p187
      $region38: #{double_conv2d.1} parent=11 // pred_check_branch
        %248 = sbr.rel (%p246) target = $region40
      $region39: #{double_conv2d.1} parent=11 // pred_region
        _
      $region40: #{double_conv2d.1} parent=11 // pred_fallthru
        _
    $region12: #{double_conv2d.1} parent=5 // pred_fallthru
      _
    %p249 = scmp.lt.s32.totalorder %s14, 2
    // Predicated region
    $region41: #{double_conv2d.1} parent=5 // pred_check
      %p250 = pneg %p249
    $region42: #{double_conv2d.1} parent=5 // pred_check_branch
      %252 = sbr.rel (%p250) target = $region44
    $region43: #{double_conv2d.1} parent=5 // pred_region
      // Predicated region
      $region45: #{double_conv2d.1} parent=43 // pred_check
        %p253 = pneg %p34
      $region46: #{double_conv2d.1} parent=43 // pred_check_branch
        %255 = sbr.rel (%p253) target = $region48
      $region47: #{double_conv2d.1} parent=43 // pred_region
        %p256 = scmp.lt.s32.totalorder %s14, 1
        %s257 = scalar_select %p256, %s14, 1
        %s258 = smul.addr %s257, 3
        %s259 = smul.addr %s258, 4
        %s260 = scalar_lea.vmem %s0, %s259
      $region48: #{double_conv2d.1} parent=43 // pred_fallthru
        _
    $region44: #{double_conv2d.1} parent=5 // pred_fallthru
      _
    %p261 = scmp.le.s32.totalorder 1, %s14
    %p262 = scmp.lt.s32.totalorder %s14, 3
    %p263 = pnand %p261, %p262
    %p264 = pneg %p263
    // Predicated region
    $region49: #{double_conv2d.1} parent=5 // pred_check
      _
    $region50: #{double_conv2d.1} parent=5 // pred_check_branch
      %266 = sbr.rel (%p263) target = $region52
    $region51: #{double_conv2d.1} parent=5 // pred_region
      %s267 = ssub.s32 %s14, 1
      %p268 = scmp.lt.s32.totalorder %s19, 1
      %s269 = scalar_select %p268, %s19, 1
      %s270 = smul.addr %s269, 3
      %s271 = smul.addr %s270, 4
      %s272 = scalar_lea.vmem %s0, %s271
      %p273 = pneg %p40
      %p274 = pneg %p37
      %p275 = pneg %p61
      %p276 = pneg %p58
      %p277 = pneg %p82
      %p278 = pneg %p79
      %p279 = pneg %p103
      %p280 = pneg %p100
      %p281 = pneg %p124
      %p282 = pneg %p121
      %p283 = pneg %p145
      %p284 = pneg %p142
      %p285 = pneg %p166
      %p286 = pneg %p163
      %p287 = pneg %p187
      %p288 = pneg %p184
      %p289 = pneg %p213
      %p290 = pneg %p210
      %p291 = scmp.lt.s32.totalorder %s19, 1
      %s292 = scalar_select %p291, %s19, 1
      %s293 = smul.addr %s292, 3
      %s294 = smul.addr %s293, 8
      %s295 = scalar_lea.vmem %s8, %s294
      %p296 = scmp.lt.s32.totalorder %s19, 1
      %s297 = scalar_select %p296, %s19, 1
      %s298 = smul.addr %s297, 3
      %s299 = smul.addr %s298, 4
      %s300 = scalar_lea.vmem %s0, %s299
      %p301 = scmp.lt.s32.totalorder %s19, 1
      %s302 = scalar_select %p301, %s19, 1
      %s303 = smul.addr %s302, 3
      %s304 = smul.addr %s303, 8
      %s305 = scalar_lea.vmem %s8, %s304
      %v306 = vld [vmem:[%s300] sm:$0xff]
      %v307 = vld [vmem:[%s300 + $0x8] sm:$0xf]
      %310 = vst [vmem:[#allocation1] ss:$2 sm:$0xff] %v306
      %s311 = scalar_lea.vmem [#allocation1], 16
      %312 = vst [vmem:[%s311] ss:$2 sm:$0xff] %v307
      %v313 = vld.sshfl [vmem:[#allocation1] sm:$0xff pattern:$0x75316420]
      %v314 = vld.sshfl [vmem:[#allocation1 + $0x8] sm:$0xff pattern:$0x75316420]
      %v315 = vld.sshfl [vmem:[#allocation1 + $0x10] sm:$0xff pattern:$0x75316420]
      %319 = vst [vmem:[#allocation3] sm:$0xf] %v313
      %320 = vst [vmem:[#allocation3 + $0x8] sm:$0xf] %v314
      %vm321 = vcmask 257024
      %322 = vst.msk [vmem:[#allocation3 + $0x10] sm:$0xf] %vm321, %v315
      %v323 = vld [vmem:[%s300] sm:$0xff]
      %v324 = vld [vmem:[%s300 + $0x8] sm:$0xf]
      %s327 = scalar_lea.vmem [#allocation1], 1
      %328 = vst [vmem:[%s327] ss:$2 sm:$0xff] %v323
      %s329 = scalar_lea.vmem [#allocation1], 17
      %330 = vst [vmem:[%s329] ss:$2 sm:$0xff] %v324
      %v331 = vld.sshfl [vmem:[#allocation1] sm:$0xff pattern:$0x75316420]
      %v332 = vld.sshfl [vmem:[#allocation1 + $0x8] sm:$0xff pattern:$0x75316420]
      %v333 = vld.sshfl [vmem:[#allocation1 + $0x10] sm:$0xff pattern:$0x75316420]
      %334 = vrot.lane.b32.xlu0 %v331, 127
      %v335 = vpop.permute.xlu0 %334
      %336 = vrot.lane.b32.xlu0 %v332, 127
      %v337 = vpop.permute.xlu0 %336
      %338 = vrot.lane.b32.xlu0 %v333, 127
      %v339 = vpop.permute.xlu0 %338
      %vm340 = vcmask 1039360
      %v341 = vsel %vm340, %v335, %v337
      %v342 = vsel %vm340, %v337, %v339
      %346 = vst [vmem:[#allocation3] sm:$0xf0] %v341
      %347 = vst [vmem:[#allocation3 + $0x8] sm:$0xf0] %v342
      %vm348 = vcmask 261124
      %349 = vst.msk [vmem:[#allocation3 + $0x10] sm:$0xf0] %vm348, %v339
      %v350 = vld [vmem:[%s300] sm:$0xff]
      %v351 = vld [vmem:[%s300 + $0x8] sm:$0xf]
      %354 = vst [vmem:[#allocation1] ss:$2 sm:$0xff] %v350
      %s355 = scalar_lea.vmem [#allocation1], 16
      %356 = vst [vmem:[%s355] ss:$2 sm:$0xff] %v351
      %v357 = vld.sshfl [vmem:[#allocation1] sm:$0xff pattern:$0x75316420]
      %v358 = vld.sshfl [vmem:[#allocation1 + $0x8] sm:$0xff pattern:$0x75316420]
      %v359 = vld.sshfl [vmem:[#allocation1 + $0x10] sm:$0xff pattern:$0x75316420]
      %360 = vrot.lane.b32.xlu0 %v357, 126
      %v361 = vpop.permute.xlu0 %360
      %362 = vrot.lane.b32.xlu0 %v358, 126
      %v363 = vpop.permute.xlu0 %362
      %364 = vrot.lane.b32.xlu0 %v359, 126
      %v365 = vpop.permute.xlu0 %364
      %vm366 = vcmask 1031168
      %v367 = vsel %vm366, %v361, %v363
      %v368 = vsel %vm366, %v363, %v365
      %372 = vst [vmem:[#allocation3 + $0x18] sm:$0xf] %v367
      %373 = vst [vmem:[#allocation3 + $0x20] sm:$0xf] %v368
      %374 = vst.msk [vmem:[#allocation3 + $0x28] sm:$0xf] %vm321, %v365
      %v375 = vld [vmem:[%s300] sm:$0xff]
      %v376 = vld [vmem:[%s300 + $0x8] sm:$0xf]
      %s379 = scalar_lea.vmem [#allocation1], 1
      %380 = vst [vmem:[%s379] ss:$2 sm:$0xff] %v375
      %s381 = scalar_lea.vmem [#allocation1], 17
      %382 = vst [vmem:[%s381] ss:$2 sm:$0xff] %v376
      %v383 = vld.sshfl [vmem:[#allocation1] sm:$0xff pattern:$0x75316420]
      %v384 = vld.sshfl [vmem:[#allocation1 + $0x8] sm:$0xff pattern:$0x75316420]
      %v385 = vld.sshfl [vmem:[#allocation1 + $0x10] sm:$0xff pattern:$0x75316420]
      %386 = vrot.lane.b32.xlu0 %v383, 110
      %v387 = vpop.permute.xlu0 %386
      %388 = vrot.lane.b32.xlu0 %v384, 110
      %v389 = vpop.permute.xlu0 %388
      %390 = vrot.lane.b32.xlu0 %v385, 110
      %v391 = vpop.permute.xlu0 %390
      %vm392 = vcmask 900096
      %v393 = vsel %vm392, %v387, %v389
      %v394 = vsel %vm392, %v389, %v391
      %398 = vst [vmem:[#allocation3 + $0x18] sm:$0xf0] %v393
      %399 = vst [vmem:[#allocation3 + $0x20] sm:$0xf0] %v394
      %400 = vst.msk [vmem:[#allocation3 + $0x28] sm:$0xf0] %vm348, %v391
      %v401 = vld [vmem:[%s300] sm:$0xff]
      %v402 = vld [vmem:[%s300 + $0x8] sm:$0xf]
      %405 = vst [vmem:[#allocation1] ss:$2 sm:$0xff] %v401
      %s406 = scalar_lea.vmem [#allocation1], 16
      %407 = vst [vmem:[%s406] ss:$2 sm:$0xff] %v402
      %v408 = vld.sshfl [vmem:[#allocation1] sm:$0xff pattern:$0x75316420]
      %v409 = vld.sshfl [vmem:[#allocation1 + $0x8] sm:$0xff pattern:$0x75316420]
      %v410 = vld.sshfl [vmem:[#allocation1 + $0x10] sm:$0xff pattern:$0x75316420]
      %411 = vrot.lane.b32.xlu0 %v408, 109
      %v412 = vpop.permute.xlu0 %411
      %413 = vrot.lane.b32.xlu0 %v409, 109
      %v414 = vpop.permute.xlu0 %413
      %415 = vrot.lane.b32.xlu0 %v410, 109
      %v416 = vpop.permute.xlu0 %415
      %vm417 = vcmask 891904
      %v418 = vsel %vm417, %v412, %v414
      %v419 = vsel %vm417, %v414, %v416
      %423 = vst [vmem:[#allocation3 + $0x30] sm:$0xf] %v418
      %424 = vst [vmem:[#allocation3 + $0x38] sm:$0xf] %v419
      %425 = vst.msk [vmem:[#allocation3 + $0x40] sm:$0xf] %vm321, %v416
      %v426 = vld [vmem:[%s300] sm:$0xff]
      %v427 = vld [vmem:[%s300 + $0x8] sm:$0xf]
      %s430 = scalar_lea.vmem [#allocation1], 1
      %431 = vst [vmem:[%s430] ss:$2 sm:$0xff] %v426
      %s432 = scalar_lea.vmem [#allocation1], 17
      %433 = vst [vmem:[%s432] ss:$2 sm:$0xff] %v427
      %v434 = vld.sshfl [vmem:[#allocation1] sm:$0xff pattern:$0x75316420]
      %v435 = vld.sshfl [vmem:[#allocation1 + $0x8] sm:$0xff pattern:$0x75316420]
      %v436 = vld.sshfl [vmem:[#allocation1 + $0x10] sm:$0xff pattern:$0x75316420]
      %437 = vrot.lane.b32.xlu0 %v434, 108
      %v438 = vpop.permute.xlu0 %437
      %439 = vrot.lane.b32.xlu0 %v435, 108
      %v440 = vpop.permute.xlu0 %439
      %441 = vrot.lane.b32.xlu0 %v436, 108
      %v442 = vpop.permute.xlu0 %441
      %vm443 = vcmask 883712
      %v444 = vsel %vm443, %v438, %v440
      %v445 = vsel %vm443, %v440, %v442
      %449 = vst [vmem:[#allocation3 + $0x30] sm:$0xf0] %v444
      %450 = vst [vmem:[#allocation3 + $0x38] sm:$0xf0] %v445
      %451 = vst.msk [vmem:[#allocation3 + $0x40] sm:$0xf0] %vm348, %v442
      %v452 = vld [vmem:[%s300] sm:$0xff]
      %v453 = vld [vmem:[%s300 + $0x8] sm:$0xf]
      %456 = vst [vmem:[#allocation1] ss:$2 sm:$0xff] %v452
      %s457 = scalar_lea.vmem [#allocation1], 16
      %458 = vst [vmem:[%s457] ss:$2 sm:$0xff] %v453
      %v459 = vld.sshfl [vmem:[#allocation1] sm:$0xff pattern:$0x75316420]
      %v460 = vld.sshfl [vmem:[#allocation1 + $0x8] sm:$0xff pattern:$0x75316420]
      %v461 = vld.sshfl [vmem:[#allocation1 + $0x10] sm:$0xff pattern:$0x75316420]
      %462 = vrot.lane.b32.xlu0 %v459, 92
      %v463 = vpop.permute.xlu0 %462
      %464 = vrot.lane.b32.xlu0 %v460, 92
      %v465 = vpop.permute.xlu0 %464
      %466 = vrot.lane.b32.xlu0 %v461, 92
      %v467 = vpop.permute.xlu0 %466
      %vm468 = vcmask 752640
      %v469 = vsel %vm468, %v463, %v465
      %v470 = vsel %vm468, %v465, %v467
      %474 = vst [vmem:[#allocation3 + $0x48] sm:$0xf] %v469
      %475 = vst [vmem:[#allocation3 + $0x50] sm:$0xf] %v470
      %476 = vst.msk [vmem:[#allocation3 + $0x58] sm:$0xf] %vm321, %v467
      %v477 = vld [vmem:[%s300] sm:$0xff]
      %v478 = vld [vmem:[%s300 + $0x8] sm:$0xf]
      %s481 = scalar_lea.vmem [#allocation1], 1
      %482 = vst [vmem:[%s481] ss:$2 sm:$0xff] %v477
      %s483 = scalar_lea.vmem [#allocation1], 17
      %484 = vst [vmem:[%s483] ss:$2 sm:$0xff] %v478
      %v485 = vld.sshfl [vmem:[#allocation1] sm:$0xff pattern:$0x75316420]
      %v486 = vld.sshfl [vmem:[#allocation1 + $0x8] sm:$0xff pattern:$0x75316420]
      %v487 = vld.sshfl [vmem:[#allocation1 + $0x10] sm:$0xff pattern:$0x75316420]
      %488 = vrot.lane.b32.xlu0 %v485, 91
      %v489 = vpop.permute.xlu0 %488
      %490 = vrot.lane.b32.xlu0 %v486, 91
      %v491 = vpop.permute.xlu0 %490
      %492 = vrot.lane.b32.xlu0 %v487, 91
      %v493 = vpop.permute.xlu0 %492
      %vm494 = vcmask 744448
      %v495 = vsel %vm494, %v489, %v491
      %v496 = vsel %vm494, %v491, %v493
      %500 = vst [vmem:[#allocation3 + $0x48] sm:$0xf0] %v495
      %501 = vst [vmem:[#allocation3 + $0x50] sm:$0xf0] %v496
      %502 = vst.msk [vmem:[#allocation3 + $0x58] sm:$0xf0] %vm348, %v493
      %v503 = vld [vmem:[%s300] sm:$0xff]
      %v504 = vld [vmem:[%s300 + $0x8] sm:$0xf]
      %507 = vst [vmem:[#allocation1] ss:$2 sm:$0xff] %v503
      %s508 = scalar_lea.vmem [#allocation1], 16
      %509 = vst [vmem:[%s508] ss:$2 sm:$0xff] %v504
      %v510 = vld.sshfl [vmem:[#allocation1] sm:$0xff pattern:$0x75316420]
      %v511 = vld.sshfl [vmem:[#allocation1 + $0x8] sm:$0xff pattern:$0x75316420]
      %v512 = vld.sshfl [vmem:[#allocation1 + $0x10] sm:$0xff pattern:$0x75316420]
      %513 = vrot.lane.b32.xlu0 %v510, 90
      %v514 = vpop.permute.xlu0 %513
      %515 = vrot.lane.b32.xlu0 %v511, 90
      %v516 = vpop.permute.xlu0 %515
      %517 = vrot.lane.b32.xlu0 %v512, 90
      %v518 = vpop.permute.xlu0 %517
      %vm519 = vcmask 736256
      %v520 = vsel %vm519, %v514, %v516
      %v521 = vsel %vm519, %v516, %v518
      %525 = vst [vmem:[#allocation3 + $0x60] sm:$0xf] %v520
      %526 = vst [vmem:[#allocation3 + $0x68] sm:$0xf] %v521
      %527 = vst.msk [vmem:[#allocation3 + $0x70] sm:$0xf] %vm321, %v518
      %v528 = vld [vmem:[%s2] sm:$0xff]
      %v529 = vld [vmem:[#allocation3] sm:$0xff]
      %v530 = vld [vmem:[#allocation3 + $0x8] sm:$0xff]
      %v531 = vld [vmem:[#allocation3 + $0x10] sm:$0xff]
      %v532 = vld [vmem:[#allocation3 + $0x18] sm:$0xff]
      %v533 = vld [vmem:[#allocation3 + $0x20] sm:$0xff]
      %v534 = vld [vmem:[#allocation3 + $0x28] sm:$0xff]
      %v535 = vld [vmem:[#allocation3 + $0x30] sm:$0xff]
      %v536 = vld [vmem:[#allocation3 + $0x38] sm:$0xff]
      %v537 = vld [vmem:[#allocation3 + $0x40] sm:$0xff]
      %v538 = vld [vmem:[#allocation3 + $0x48] sm:$0xff]
      %v539 = vld [vmem:[#allocation3 + $0x50] sm:$0xff]
      %v540 = vld [vmem:[#allocation3 + $0x58] sm:$0xff]
      %v541 = vld [vmem:[#allocation3 + $0x60] sm:$0xf]
      %v542 = vld [vmem:[#allocation3 + $0x68] sm:$0xf]
      %v543 = vld [vmem:[#allocation3 + $0x70] sm:$0xf]
      %vm544 = vcmask 293888
      %v546 = vsel %vm544, %v528, 0
      %vm548 = vcmask 1043456
      %v550 = vsel %vm548, %v541, 0
      %v553 = vsel %vm548, %v542, 0
      %v556 = vsel %vm548, %v543, 0
      %558 = vmatpush.msra.mxu0 0.0
      %559 = vmatpush.msra.mxu0 0.0
      %560 = vmatpush.msra.mxu0 0.0
      %561 = vmatpush.msra.mxu0 0.0
      %562 = vmatpush.msra.mxu0 0.0
      %563 = vmatpush.msra.mxu0 0.0
      %564 = vmatpush.msra.mxu0 0.0
      %565 = vmatpush.msra.mxu0 0.0
      %566 = vmatpush.msra.mxu0 0.0
      %567 = vmatpush.msra.mxu0 0.0
      %568 = vmatpush.msra.mxu0 0.0
      %569 = vmatpush.msra.mxu0 %v550
      %570 = vmatpush.msra.mxu0 %v538
      %571 = vmatpush.msra.mxu0 %v535
      %572 = vmatpush.msra.mxu0 %v532
      %573 = vmatpush.msra.mxu0 %v529
      %574 = vmatmul.f32.gmra.mxu0 %v546
      %v575 = vpop.f32.mrf.mxu0
      %v576 = vadd.f32 0.0, %v575
      %577 = vdwg.mxu0
      %578 = vmatpush.msra.mxu0 0.0
      %579 = vmatpush.msra.mxu0 0.0
      %580 = vmatpush.msra.mxu0 0.0
      %581 = vmatpush.msra.mxu0 0.0
      %582 = vmatpush.msra.mxu0 0.0
      %583 = vmatpush.msra.mxu0 0.0
      %584 = vmatpush.msra.mxu0 0.0
      %585 = vmatpush.msra.mxu0 0.0
      %586 = vmatpush.msra.mxu0 0.0
      %587 = vmatpush.msra.mxu0 0.0
      %588 = vmatpush.msra.mxu0 0.0
      %589 = vmatpush.msra.mxu0 %v553
      %590 = vmatpush.msra.mxu0 %v539
      %591 = vmatpush.msra.mxu0 %v536
      %592 = vmatpush.msra.mxu0 %v533
      %593 = vmatpush.msra.mxu0 %v530
      %594 = vmatmul.f32.gmra.mxu0 %v546
      %v595 = vpop.f32.mrf.mxu0
      %v596 = vadd.f32 0.0, %v595
      %597 = vdwg.mxu0
      %598 = vmatpush.msra.mxu0 0.0
      %599 = vmatpush.msra.mxu0 0.0
      %600 = vmatpush.msra.mxu0 0.0
      %601 = vmatpush.msra.mxu0 0.0
      %602 = vmatpush.msra.mxu0 0.0
      %603 = vmatpush.msra.mxu0 0.0
      %604 = vmatpush.msra.mxu0 0.0
      %605 = vmatpush.msra.mxu0 0.0
      %606 = vmatpush.msra.mxu0 0.0
      %607 = vmatpush.msra.mxu0 0.0
      %608 = vmatpush.msra.mxu0 0.0
      %609 = vmatpush.msra.mxu0 %v556
      %610 = vmatpush.msra.mxu0 %v540
      %611 = vmatpush.msra.mxu0 %v537
      %612 = vmatpush.msra.mxu0 %v534
      %613 = vmatpush.msra.mxu0 %v531
      %614 = vmatmul.f32.gmra.mxu0 %v546
      %v615 = vpop.f32.mrf.mxu0
      %v616 = vadd.f32 0.0, %v615
      %617 = vdwg.mxu0
      %v618 = vld [vmem:[%s3] sm:$0xff]
      %620 = vset.pattern.permute.xlu0 0
      %621 = vperm.xlu0 %620, %v618
      %v622 = vpop.permute.xlu0 %621
      %v624 = vmul.f32 %v576, %v622
      %v625 = vmul.f32 %v596, %v622
      %v626 = vmul.f32 %v616, %v622
      %v627 = vld [vmem:[%s4] sm:$0xff]
      %629 = vset.pattern.permute.xlu0 0
      %630 = vperm.xlu0 %629, %v627
      %v631 = vpop.permute.xlu0 %630
      %v633 = vadd.f32 %v624, %v631
      %v634 = vadd.f32 %v625, %v631
      %v635 = vadd.f32 %v626, %v631
      %v636 = vmax.f32 %v633, 0.0
      %v637 = vmax.f32 %v634, 0.0
      %v638 = vmax.f32 %v635, 0.0
      %v639 = vld [vmem:[%s1] sm:$0x7]
      %v641 = vperm.slane %v639, 0
      %v642 = vperm.slane %v639, 1
      %v643 = vperm.slane %v639, 2
      %v647 = vmul.f32 %v636, %v641
      %v648 = vmul.f32 %v637, %v642
      %v649 = vmul.f32 %v638, %v643
      %vm650 = vcmask 154624
      %651 = vst.msk [vmem:[#allocation2] sm:$0xff] %vm650, 0.0
      %vm652 = vcmask 703896
      %653 = vst.msk [vmem:[#allocation2 + $0x10] sm:$0xff] %vm652, 0.0
      %657 = vrot.lane.b32.xlu0 %v647, 19
      %v658 = vpop.permute.xlu0 %657
      %659 = vrot.lane.b32.xlu0 %v648, 19
      %v660 = vpop.permute.xlu0 %659
      %661 = vrot.lane.b32.xlu0 %v649, 19
      %v662 = vpop.permute.xlu0 %661
      %v663 = vsel %vm650, %v658, %v660
      %v664 = vsel %vm650, %v660, %v662
      %vm668 = vcmask 1047704
      %669 = vst.msk [vmem:[#allocation2] sm:$0xff] %vm668, %v658
      %670 = vst [vmem:[#allocation2 + $0x8] sm:$0xff] %v663
      %vm671 = vcmask 416768
      %672 = vst.msk [vmem:[#allocation2 + $0x10] sm:$0xff] %vm671, %v664
      %v673 = vld [vmem:[#allocation2] sm:$0xff]
      %v674 = vld [vmem:[#allocation2 + $0x8] sm:$0xff]
      %v675 = vld [vmem:[#allocation2 + $0x10] sm:$0xff]
      %676 = vst [vmem:[#allocation4] sm:$0xff] %v673
      %677 = vst [vmem:[#allocation4 + $0x8] sm:$0xff] %v674
      %vm678 = vcmask 261120
      %679 = vst.msk [vmem:[#allocation4 + $0x10] sm:$0xff] %vm678, %v675
      %v680 = vld [vmem:[#allocation2] sm:$0xff]
      %v681 = vld [vmem:[#allocation2 + $0x8] sm:$0xff]
      %v682 = vld [vmem:[#allocation2 + $0x10] sm:$0xff]
      %686 = vrot.lane.b32.xlu0 %v680, 127
      %v687 = vpop.permute.xlu0 %686
      %688 = vrot.lane.b32.xlu0 %v681, 127
      %v689 = vpop.permute.xlu0 %688
      %690 = vrot.lane.b32.xlu0 %v682, 127
      %v691 = vpop.permute.xlu0 %690
      %v692 = vsel %vm340, %v687, %v689
      %v693 = vsel %vm340, %v689, %v691
      %697 = vst [vmem:[#allocation4 + $0x18] sm:$0xff] %v692
      %698 = vst [vmem:[#allocation4 + $0x20] sm:$0xff] %v693
      %699 = vst.msk [vmem:[#allocation4 + $0x28] sm:$0xff] %vm678, %v691
      %v700 = vld [vmem:[#allocation2] sm:$0xff]
      %v701 = vld [vmem:[#allocation2 + $0x8] sm:$0xff]
      %v702 = vld [vmem:[#allocation2 + $0x10] sm:$0xff]
      %706 = vrot.lane.b32.xlu0 %v700, 126
      %v707 = vpop.permute.xlu0 %706
      %708 = vrot.lane.b32.xlu0 %v701, 126
      %v709 = vpop.permute.xlu0 %708
      %710 = vrot.lane.b32.xlu0 %v702, 126
      %v711 = vpop.permute.xlu0 %710
      %v712 = vsel %vm366, %v707, %v709
      %v713 = vsel %vm366, %v709, %v711
      %717 = vst [vmem:[#allocation4 + $0x30] sm:$0xff] %v712
      %718 = vst [vmem:[#allocation4 + $0x38] sm:$0xff] %v713
      %719 = vst.msk [vmem:[#allocation4 + $0x40] sm:$0xff] %vm678, %v711
      %v720 = vld [vmem:[#allocation2] sm:$0xff]
      %v721 = vld [vmem:[#allocation2 + $0x8] sm:$0xff]
      %v722 = vld [vmem:[#allocation2 + $0x10] sm:$0xff]
      %726 = vrot.lane.b32.xlu0 %v720, 110
      %v727 = vpop.permute.xlu0 %726
      %728 = vrot.lane.b32.xlu0 %v721, 110
      %v729 = vpop.permute.xlu0 %728
      %730 = vrot.lane.b32.xlu0 %v722, 110
      %v731 = vpop.permute.xlu0 %730
      %v732 = vsel %vm392, %v727, %v729
      %v733 = vsel %vm392, %v729, %v731
      %737 = vst [vmem:[#allocation4 + $0x48] sm:$0xff] %v732
      %738 = vst [vmem:[#allocation4 + $0x50] sm:$0xff] %v733
      %739 = vst.msk [vmem:[#allocation4 + $0x58] sm:$0xff] %vm678, %v731
      %v740 = vld [vmem:[#allocation2] sm:$0xff]
      %v741 = vld [vmem:[#allocation2 + $0x8] sm:$0xff]
      %v742 = vld [vmem:[#allocation2 + $0x10] sm:$0xff]
      %746 = vrot.lane.b32.xlu0 %v740, 109
      %v747 = vpop.permute.xlu0 %746
      %748 = vrot.lane.b32.xlu0 %v741, 109
      %v749 = vpop.permute.xlu0 %748
      %750 = vrot.lane.b32.xlu0 %v742, 109
      %v751 = vpop.permute.xlu0 %750
      %v752 = vsel %vm417, %v747, %v749
      %v753 = vsel %vm417, %v749, %v751
      %757 = vst [vmem:[#allocation4 + $0x60] sm:$0xff] %v752
      %758 = vst [vmem:[#allocation4 + $0x68] sm:$0xff] %v753
      %759 = vst.msk [vmem:[#allocation4 + $0x70] sm:$0xff] %vm678, %v751
      %v760 = vld [vmem:[#allocation2] sm:$0xff]
      %v761 = vld [vmem:[#allocation2 + $0x8] sm:$0xff]
      %v762 = vld [vmem:[#allocation2 + $0x10] sm:$0xff]
      %766 = vrot.lane.b32.xlu0 %v760, 108
      %v767 = vpop.permute.xlu0 %766
      %768 = vrot.lane.b32.xlu0 %v761, 108
      %v769 = vpop.permute.xlu0 %768
      %770 = vrot.lane.b32.xlu0 %v762, 108
      %v771 = vpop.permute.xlu0 %770
      %v772 = vsel %vm443, %v767, %v769
      %v773 = vsel %vm443, %v769, %v771
      %777 = vst [vmem:[#allocation4 + $0x78] sm:$0xff] %v772
      %778 = vst [vmem:[#allocation4 + $0x80] sm:$0xff] %v773
      %779 = vst.msk [vmem:[#allocation4 + $0x88] sm:$0xff] %vm678, %v771
      %v780 = vld [vmem:[#allocation2] sm:$0xff]
      %v781 = vld [vmem:[#allocation2 + $0x8] sm:$0xff]
      %v782 = vld [vmem:[#allocation2 + $0x10] sm:$0xff]
      %786 = vrot.lane.b32.xlu0 %v780, 92
      %v787 = vpop.permute.xlu0 %786
      %788 = vrot.lane.b32.xlu0 %v781, 92
      %v789 = vpop.permute.xlu0 %788
      %790 = vrot.lane.b32.xlu0 %v782, 92
      %v791 = vpop.permute.xlu0 %790
      %v792 = vsel %vm468, %v787, %v789
      %v793 = vsel %vm468, %v789, %v791
      %797 = vst [vmem:[#allocation4 + $0x90] sm:$0xff] %v792
      %798 = vst [vmem:[#allocation4 + $0x98] sm:$0xff] %v793
      %799 = vst.msk [vmem:[#allocation4 + $0xa0] sm:$0xff] %vm678, %v791
      %v800 = vld [vmem:[#allocation2] sm:$0xff]
      %v801 = vld [vmem:[#allocation2 + $0x8] sm:$0xff]
      %v802 = vld [vmem:[#allocation2 + $0x10] sm:$0xff]
      %806 = vrot.lane.b32.xlu0 %v800, 91
      %v807 = vpop.permute.xlu0 %806
      %808 = vrot.lane.b32.xlu0 %v801, 91
      %v809 = vpop.permute.xlu0 %808
      %810 = vrot.lane.b32.xlu0 %v802, 91
      %v811 = vpop.permute.xlu0 %810
      %v812 = vsel %vm494, %v807, %v809
      %v813 = vsel %vm494, %v809, %v811
      %817 = vst [vmem:[#allocation4 + $0xa8] sm:$0xff] %v812
      %818 = vst [vmem:[#allocation4 + $0xb0] sm:$0xff] %v813
      %819 = vst.msk [vmem:[#allocation4 + $0xb8] sm:$0xff] %vm678, %v811
      %v820 = vld [vmem:[#allocation2] sm:$0xff]
      %v821 = vld [vmem:[#allocation2 + $0x8] sm:$0xff]
      %v822 = vld [vmem:[#allocation2 + $0x10] sm:$0xff]
      %826 = vrot.lane.b32.xlu0 %v820, 90
      %v827 = vpop.permute.xlu0 %826
      %828 = vrot.lane.b32.xlu0 %v821, 90
      %v829 = vpop.permute.xlu0 %828
      %830 = vrot.lane.b32.xlu0 %v822, 90
      %v831 = vpop.permute.xlu0 %830
      %v832 = vsel %vm519, %v827, %v829
      %v833 = vsel %vm519, %v829, %v831
      %837 = vst [vmem:[#allocation4 + $0xc0] sm:$0xff] %v832
      %838 = vst [vmem:[#allocation4 + $0xc8] sm:$0xff] %v833
      %839 = vst.msk [vmem:[#allocation4 + $0xd0] sm:$0xff] %vm678, %v831
      %v840 = vld [vmem:[%s5] sm:$0xff]
      %v841 = vld [vmem:[#allocation4] sm:$0xff]
      %v842 = vld [vmem:[#allocation4 + $0x8] sm:$0xff]
      %v843 = vld [vmem:[#allocation4 + $0x10] sm:$0xff]
      %v844 = vld [vmem:[#allocation4 + $0x18] sm:$0xff]
      %v845 = vld [vmem:[#allocation4 + $0x20] sm:$0xff]
      %v846 = vld [vmem:[#allocation4 + $0x28] sm:$0xff]
      %v847 = vld [vmem:[#allocation4 + $0x30] sm:$0xff]
      %v848 = vld [vmem:[#allocation4 + $0x38] sm:$0xff]
      %v849 = vld [vmem:[#allocation4 + $0x40] sm:$0xff]
      %v850 = vld [vmem:[#allocation4 + $0x48] sm:$0xff]
      %v851 = vld [vmem:[#allocation4 + $0x50] sm:$0xff]
      %v852 = vld [vmem:[#allocation4 + $0x58] sm:$0xff]
      %v853 = vld [vmem:[#allocation4 + $0x60] sm:$0xff]
      %v854 = vld [vmem:[#allocation4 + $0x68] sm:$0xff]
      %v855 = vld [vmem:[#allocation4 + $0x70] sm:$0xff]
      %v856 = vld [vmem:[#allocation4 + $0x78] sm:$0xff]
      %v857 = vld [vmem:[#allocation4 + $0x80] sm:$0xff]
      %v858 = vld [vmem:[#allocation4 + $0x88] sm:$0xff]
      %v859 = vld [vmem:[#allocation4 + $0x90] sm:$0xff]
      %v860 = vld [vmem:[#allocation4 + $0x98] sm:$0xff]
      %v861 = vld [vmem:[#allocation4 + $0xa0] sm:$0xff]
      %v862 = vld [vmem:[#allocation4 + $0xa8] sm:$0xff]
      %v863 = vld [vmem:[#allocation4 + $0xb0] sm:$0xff]
      %v864 = vld [vmem:[#allocation4 + $0xb8] sm:$0xff]
      %v865 = vld [vmem:[#allocation4 + $0xc0] sm:$0xff]
      %v866 = vld [vmem:[#allocation4 + $0xc8] sm:$0xff]
      %v867 = vld [vmem:[#allocation4 + $0xd0] sm:$0xff]
      %vm868 = vcmask 588800
      %v870 = vsel %vm868, %v840, 0
      %872 = vmatpush.msra.mxu0 0.0
      %873 = vmatpush.msra.mxu0 0.0
      %874 = vmatpush.msra.mxu0 0.0
      %875 = vmatpush.msra.mxu0 0.0
      %876 = vmatpush.msra.mxu0 0.0
      %877 = vmatpush.msra.mxu0 0.0
      %878 = vmatpush.msra.mxu0 0.0
      %879 = vmatpush.msra.mxu0 %v865
      %880 = vmatpush.msra.mxu0 %v862
      %881 = vmatpush.msra.mxu0 %v859
      %882 = vmatpush.msra.mxu0 %v856
      %883 = vmatpush.msra.mxu0 %v853
      %884 = vmatpush.msra.mxu0 %v850
      %885 = vmatpush.msra.mxu0 %v847
      %886 = vmatpush.msra.mxu0 %v844
      %887 = vmatpush.msra.mxu0 %v841
      %888 = vmatmul.f32.gmra.mxu0 %v870
      %v889 = vpop.f32.mrf.mxu0
      %v890 = vadd.f32 0.0, %v889
      %891 = vdwg.mxu0
      %892 = vmatpush.msra.mxu0 0.0
      %893 = vmatpush.msra.mxu0 0.0
      %894 = vmatpush.msra.mxu0 0.0
      %895 = vmatpush.msra.mxu0 0.0
      %896 = vmatpush.msra.mxu0 0.0
      %897 = vmatpush.msra.mxu0 0.0
      %898 = vmatpush.msra.mxu0 0.0
      %899 = vmatpush.msra.mxu0 %v866
      %900 = vmatpush.msra.mxu0 %v863
      %901 = vmatpush.msra.mxu0 %v860
      %902 = vmatpush.msra.mxu0 %v857
      %903 = vmatpush.msra.mxu0 %v854
      %904 = vmatpush.msra.mxu0 %v851
      %905 = vmatpush.msra.mxu0 %v848
      %906 = vmatpush.msra.mxu0 %v845
      %907 = vmatpush.msra.mxu0 %v842
      %908 = vmatmul.f32.gmra.mxu0 %v870
      %v909 = vpop.f32.mrf.mxu0
      %v910 = vadd.f32 0.0, %v909
      %911 = vdwg.mxu0
      %912 = vmatpush.msra.mxu0 0.0
      %913 = vmatpush.msra.mxu0 0.0
      %914 = vmatpush.msra.mxu0 0.0
      %915 = vmatpush.msra.mxu0 0.0
      %916 = vmatpush.msra.mxu0 0.0
      %917 = vmatpush.msra.mxu0 0.0
      %918 = vmatpush.msra.mxu0 0.0
      %919 = vmatpush.msra.mxu0 %v867
      %920 = vmatpush.msra.mxu0 %v864
      %921 = vmatpush.msra.mxu0 %v861
      %922 = vmatpush.msra.mxu0 %v858
      %923 = vmatpush.msra.mxu0 %v855
      %924 = vmatpush.msra.mxu0 %v852
      %925 = vmatpush.msra.mxu0 %v849
      %926 = vmatpush.msra.mxu0 %v846
      %927 = vmatpush.msra.mxu0 %v843
      %928 = vmatmul.f32.gmra.mxu0 %v870
      %v929 = vpop.f32.mrf.mxu0
      %v930 = vadd.f32 0.0, %v929
      %931 = vdwg.mxu0
      %v932 = vld [vmem:[%s6] sm:$0xff]
      %934 = vset.pattern.permute.xlu0 0
      %935 = vperm.xlu0 %934, %v932
      %v936 = vpop.permute.xlu0 %935
      %v938 = vmul.f32 %v890, %v936
      %v939 = vmul.f32 %v910, %v936
      %v940 = vmul.f32 %v930, %v936
      %v941 = vld [vmem:[%s7] sm:$0xff]
      %943 = vset.pattern.permute.xlu0 0
      %944 = vperm.xlu0 %943, %v941
      %v945 = vpop.permute.xlu0 %944
      %v947 = vadd.f32 %v938, %v945
      %v948 = vadd.f32 %v939, %v945
      %v949 = vadd.f32 %v940, %v945
      %v950 = vmax.f32 %v947, 0.0
      %v951 = vmax.f32 %v948, 0.0
      %v952 = vmax.f32 %v949, 0.0
      %953 = vst [vmem:[%s305] sm:$0xff] %v950
      %954 = vst [vmem:[%s305 + $0x8] sm:$0xff] %v951
      %955 = vst.msk [vmem:[%s305 + $0x10] sm:$0xff] %vm678, %v952
      %p956 = scmp.lt.s32.totalorder %s19, 1
      %s957 = scalar_select %p956, %s19, 1
      %s958 = smul.addr %s957, 3
      %s959 = smul.addr %s958, 8
      %s960 = scalar_lea.vmem %s8, %s959
      // Predicated region
      $region53: #{double_conv2d.1} parent=51 // pred_check
        %p961 = pneg %p210
      $region54: #{double_conv2d.1} parent=51 // pred_check_branch
        %963 = sbr.rel (%p961) target = $region56
      $region55: #{double_conv2d.1} parent=51 // pred_region
        _
      $region56: #{double_conv2d.1} parent=51 // pred_fallthru
        _
    $region52: #{double_conv2d.1} parent=5 // pred_fallthru
      _
    %p964 = scmp.le.s32.totalorder 2, %s14
    // Predicated region
    $region57: #{double_conv2d.1} parent=5 // pred_check
      %p965 = pneg %p964
    $region58: #{double_conv2d.1} parent=5 // pred_check_branch
      %967 = sbr.rel (%p965) target = $region60
    $region59: #{double_conv2d.1} parent=5 // pred_region
      %s968 = ssub.s32 %s14, 2
      // Predicated region
      $region61: #{double_conv2d.1} parent=59 // pred_check
        %p969 = pneg %p216
      $region62: #{double_conv2d.1} parent=59 // pred_check_branch
        %971 = sbr.rel (%p969) target = $region64
      $region63: #{double_conv2d.1} parent=59 // pred_region
        %p972 = scmp.lt.s32.totalorder %s20, 1
        %s973 = scalar_select %p972, %s20, 1
        %s974 = smul.addr %s973, 3
        %s975 = smul.addr %s974, 8
        %s976 = scalar_lea.vmem %s8, %s975
      $region64: #{double_conv2d.1} parent=59 // pred_fallthru
        _
    $region60: #{double_conv2d.1} parent=5 // pred_fallthru
      _
  $region6: #{double_conv2d.1} parent=0 // loop_footer
    %s18 = sadd.s32 1, %s14
  $region7: #{double_conv2d.1} parent=0 // loop_footer_branch
    %13 = sbr.rel target = $region3
  $region8: #{double_conv2d.1} parent=0 // loop_exit
    _

</llo_original>
